<compile_context>
chip_gen: v7x
topology: tpu7x:2x2x1
jax: 0.10.0
libtpu: 0.0.40
codegen_flags: <defaults>
</compile_context>

<pallas_src>
import functools

import jax
import jax.numpy as jnp
from jax.experimental import pallas as pl
from jax.experimental.pallas import tpu as pltpu


def _round_up(x, m):
    return (x + m - 1) // m * m


def _siren_kernel_eval(x_ref, w_ref, b_ref, o_ref, acc_ref, *, w0):
    k = pl.program_id(2)

    @pl.when(k == 0)
    def _():
        acc_ref[...] = jnp.zeros_like(acc_ref)

    acc_ref[...] += jnp.dot(x_ref[...], w_ref[...],
                            preferred_element_type=jnp.float32)

    @pl.when(k == pl.num_programs(2) - 1)
    def _():
        y = acc_ref[...] + b_ref[...]
        o_ref[...] = jnp.sin(jnp.float32(w0) * y).astype(o_ref.dtype)


def _siren_kernel_train(x_ref, w_ref, b_ref, bits_ref, o_ref, acc_ref, *,
                        keep_threshold, combined_scale):
    k = pl.program_id(2)

    @pl.when(k == 0)
    def _():
        acc_ref[...] = jnp.zeros_like(acc_ref)

    acc_ref[...] += jnp.dot(x_ref[...], w_ref[...],
                            preferred_element_type=jnp.float32)

    @pl.when(k == pl.num_programs(2) - 1)
    def _():
        y = acc_ref[...] + b_ref[...]
        # Dropout mask: one uint32 compare (no uint->float convert).
        keep = bits_ref[...] >= jnp.uint32(keep_threshold)
        # Single fused scalar multiply: w0 / (1 - p).
        s = jnp.sin(y * jnp.float32(combined_scale))
        # Dropped element -> sin(w0 * 0) == 0.
        o_ref[...] = jnp.where(keep, s, jnp.float32(0.0)).astype(o_ref.dtype)


def prepare_siren_params(weight, bias):
    """Hoist the nn.Linear weight transpose out of the per-call path."""
    return jnp.asarray(weight).T, jnp.asarray(bias)


def siren_layer(x, weight_t, bias, *, w0=30.0, dropout_prob=0.5,
                training=False, rng_key=None,
                tile_m=None, tile_n=None, tile_k=None, mxu_dtype=None):
    """Pallas TPU implementation of SirenLayer.forward.

    x:        [B, in_features]
    weight_t: [in_features, out_features]  (pre-transposed, see prepare_siren_params)
    bias:     [out_features]
    """
    x = jnp.asarray(x)
    weight_t = jnp.asarray(weight_t)
    bias = jnp.asarray(bias)

    B, in_f = x.shape
    in_f2, out_f = weight_t.shape
    assert in_f == in_f2 and bias.shape == (out_f,)
    out_dtype = x.dtype

    # ---- tile selection (sublane/lane aligned, VMEM-bounded) ----
    b8 = _round_up(B, 8)
    if tile_m is None:
        tile_m = min(b8, 512)
    tile_m = _round_up(tile_m, 8)
    b_p = _round_up(b8, tile_m)

    out_128 = _round_up(out_f, 128)
    if tile_n is None:
        tile_n = min(out_128, 256)
    tile_n = _round_up(tile_n, 128)
    out_p = _round_up(out_128, tile_n)

    if tile_k is None:
        tile_k = in_f if in_f <= 1024 else 512
    if tile_k >= in_f:
        tile_k, in_p = in_f, in_f
    else:
        tile_k = _round_up(tile_k, 128)
        in_p = _round_up(in_f, tile_k)

    # ---- zero-pad to tile boundaries (padded rows/cols contribute nothing) ----
    if (b_p, in_p) != (B, in_f):
        x_p = jnp.pad(x, ((0, b_p - B), (0, in_p - in_f)))
    else:
        x_p = x
    if (in_p, out_p) != (in_f, out_f):
        w_p = jnp.pad(weight_t, ((0, in_p - in_f), (0, out_p - out_f)))
    else:
        w_p = weight_t
    b_vec = bias.astype(jnp.float32).reshape(1, out_f)
    if out_p != out_f:
        b_vec = jnp.pad(b_vec, ((0, 0), (0, out_p - out_f)))

    if mxu_dtype is not None:  # e.g. jnp.bfloat16 on v6e/v7x: halves operand DMA.
        x_p = x_p.astype(mxu_dtype)
        w_p = w_p.astype(mxu_dtype)

    grid = (b_p // tile_m, out_p // tile_n, in_p // tile_k)

    x_spec = pl.BlockSpec((tile_m, tile_k), lambda i, j, k: (i, k))
    w_spec = pl.BlockSpec((tile_k, tile_n), lambda i, j, k: (k, j))
    b_spec = pl.BlockSpec((1, tile_n), lambda i, j, k: (0, j))
    o_spec = pl.BlockSpec((tile_m, tile_n), lambda i, j, k: (i, j))

    out_shape = jax.ShapeDtypeStruct((b_p, out_p), out_dtype)
    scratch = [pltpu.VMEM((tile_m, tile_n), jnp.float32)]

    flops = 2 * b_p * in_p * out_p
    transcendentals = b_p * out_p
    bytes_accessed = (x_p.size * x_p.dtype.itemsize
                      + w_p.size * w_p.dtype.itemsize
                      + b_vec.size * 4
                      + b_p * out_p * jnp.dtype(out_dtype).itemsize)

    compiler_params = pltpu.CompilerParams(
        dimension_semantics=("parallel", "parallel", "arbitrary"),
        vmem_limit_bytes=32 * 1024 * 1024)

    if (not training) or dropout_prob == 0.0:
        kernel = functools.partial(_siren_kernel_eval, w0=float(w0))
        out = pl.pallas_call(
            kernel,
            out_shape=out_shape,
            grid_spec=pltpu.PrefetchScalarGridSpec(
                num_scalar_prefetch=0,
                grid=grid,
                in_specs=[x_spec, w_spec, b_spec],
                out_specs=o_spec,
                scratch_shapes=scratch),
            compiler_params=compiler_params,
            cost_estimate=pl.CostEstimate(
                flops=flops, transcendentals=transcendentals,
                bytes_accessed=bytes_accessed),
        )(x_p, w_p, b_vec)
    else:
        if rng_key is None:
            raise ValueError("training=True requires rng_key")
        # TODO(synk): dropout mask is deterministic per rng_key but not
        # bit-identical to torch's RNG stream.
        bits = jax.random.bits(rng_key, (b_p, out_p), dtype=jnp.uint32)
        keep_threshold = min(int(round(float(dropout_prob) * 2.0 ** 32)),
                             2 ** 32 - 1)
        combined_scale = float(w0) / (1.0 - float(dropout_prob))
        bits_spec = pl.BlockSpec((tile_m, tile_n), lambda i, j, k: (i, j))
        kernel = functools.partial(_siren_kernel_train,
                                   keep_threshold=keep_threshold,
                                   combined_scale=combined_scale)
        out = pl.pallas_call(
            kernel,
            out_shape=out_shape,
            grid_spec=pltpu.PrefetchScalarGridSpec(
                num_scalar_prefetch=0,
                grid=grid,
                in_specs=[x_spec, w_spec, b_spec, bits_spec],
                out_specs=o_spec,
                scratch_shapes=scratch),
            compiler_params=compiler_params,
            cost_estimate=pl.CostEstimate(
                flops=flops, transcendentals=transcendentals,
                bytes_accessed=bytes_accessed + bits.size * 4),
        )(x_p, w_p, b_vec, bits)

    if (b_p, out_p) != (B, out_f):
        out = out[:B, :out_f]
    return out


if __name__ == "__main__":
    key = jax.random.PRNGKey(0)
    kx, kw, kb, kd = jax.random.split(key, 4)

    B, in_features, out_features = 8, 32, 32
    w0 = 30.0

    # Deterministic init mimicking nn.Linear: U(-1/sqrt(in), 1/sqrt(in)).
    bound = 1.0 / (in_features ** 0.5)
    weight = jax.random.uniform(
        kw, (out_features, in_features), jnp.float32, -bound, bound)
    bias = jax.random.uniform(kb, (out_features,), jnp.float32, -bound, bound)
    x = jax.random.normal(kx, (B, in_features), jnp.float32)

    # Hoist the weight transpose once (not per forward call).
    w_t, b = prepare_siren_params(weight, bias)

    # Eval-mode forward (dropout == identity).
    out = jax.block_until_ready(siren_layer(x, w_t, b, w0=w0, training=False))
    ref = jnp.sin(w0 * (x @ weight.T + bias))
    assert out.shape == (B, out_features)
    max_err = float(jnp.max(jnp.abs(out - ref)))
    assert max_err < 2e-2, f"mismatch vs reference: max abs err {max_err}"

    # Training-mode forward (inverted dropout, external uint32 random bits).
    out_train = jax.block_until_ready(
        siren_layer(x, w_t, b, w0=w0, dropout_prob=0.5,
                    training=True, rng_key=kd))
    assert out_train.shape == (B, out_features)
    assert bool(jnp.all(jnp.isfinite(out_train)))

    print("KERNEL_OK")
</pallas_src>

<mosaic_0001>
module attributes {stable_mosaic.version = 11 : i64} {
  func.func @_siren_kernel_eval(%arg0: i32, %arg1: i32, %arg2: i32, %arg3: memref<8x32xf32, #tpu.memory_space<vmem>>, %arg4: memref<32x128xf32, #tpu.memory_space<vmem>>, %arg5: memref<1x128xf32, #tpu.memory_space<vmem>>, %arg6: memref<8x128xf32, #tpu.memory_space<vmem>>, %arg7: memref<8x128xf32, #tpu.memory_space<vmem>>) attributes {dimension_semantics = [#tpu.dimension_semantics<parallel>, #tpu.dimension_semantics<parallel>, #tpu.dimension_semantics<arbitrary>], iteration_bounds = array<i64: 1, 1, 1>, scalar_prefetch = 0 : i64, scratch_operands = 1 : i64, tpu.core_type = #tpu.core_type<tc>, window_params = [{transform_indices = @transform_0, window_bounds = array<i64: 8, 32>}, {transform_indices = @transform_1, window_bounds = array<i64: 32, 128>}, {transform_indices = @transform_2, window_bounds = array<i64: 1, 128>}, {transform_indices = @transform_3, window_bounds = array<i64: 8, 128>}]} {
    %c0_i32 = arith.constant 0 : i32
    %0 = arith.cmpi eq, %arg2, %c0_i32 : i32
    %1 = arith.extui %0 : i1 to i32
    %c0_i32_0 = arith.constant 0 : i32
    %2 = arith.cmpi ne, %1, %c0_i32_0 : i32
    scf.if %2 {
      %cst_10 = arith.constant 0.000000e+00 : f32
      %12 = vector.broadcast %cst_10 : f32 to vector<8x128xf32>
      %c0_11 = arith.constant 0 : index
      %c0_12 = arith.constant 0 : index
      %13 = vector.load %arg7[%c0_11, %c0_12] : memref<8x128xf32, #tpu.memory_space<vmem>>, vector<8x128xf32>
      tpu.vector_store %arg7[%c0_11, %c0_12], %12 {strides = array<i32>} : memref<8x128xf32, #tpu.memory_space<vmem>>, vector<8x128xf32>,
    } else {
    }
    %c0 = arith.constant 0 : index
    %c0_1 = arith.constant 0 : index
    %3 = vector.load %arg7[%c0, %c0_1] : memref<8x128xf32, #tpu.memory_space<vmem>>, vector<8x128xf32>
    %c0_2 = arith.constant 0 : index
    %c0_3 = arith.constant 0 : index
    %4 = vector.load %arg3[%c0_2, %c0_3] : memref<8x32xf32, #tpu.memory_space<vmem>>, vector<8x32xf32>
    %c0_4 = arith.constant 0 : index
    %c0_5 = arith.constant 0 : index
    %5 = vector.load %arg4[%c0_4, %c0_5] : memref<32x128xf32, #tpu.memory_space<vmem>>, vector<32x128xf32>
    %cst = arith.constant dense<0.000000e+00> : vector<8x128xf32>
    %6 = tpu.matmul %4, %5, %cst {dimension_numbers = #tpu.dot_dimension_numbers<[1], [0], [0], [1], [0, 0, 1, 1], [], []>} : vector<8x32xf32>, vector<32x128xf32>, vector<8x128xf32> -> vector<8x128xf32>
    %7 = arith.addf %3, %6 : vector<8x128xf32>
    %c0_6 = arith.constant 0 : index
    %c0_7 = arith.constant 0 : index
    %8 = vector.load %arg7[%c0_6, %c0_7] : memref<8x128xf32, #tpu.memory_space<vmem>>, vector<8x128xf32>
    tpu.vector_store %arg7[%c0_6, %c0_7], %7 {strides = array<i32>} : memref<8x128xf32, #tpu.memory_space<vmem>>, vector<8x128xf32>,
    %c0_i32_8 = arith.constant 0 : i32
    %9 = arith.cmpi eq, %arg2, %c0_i32_8 : i32
    %10 = arith.extui %9 : i1 to i32
    %c0_i32_9 = arith.constant 0 : i32
    %11 = arith.cmpi ne, %10, %c0_i32_9 : i32
    scf.if %11 {
      %c0_10 = arith.constant 0 : index
      %c0_11 = arith.constant 0 : index
      %12 = vector.load %arg7[%c0_10, %c0_11] : memref<8x128xf32, #tpu.memory_space<vmem>>, vector<8x128xf32>
      %c0_12 = arith.constant 0 : index
      %c0_13 = arith.constant 0 : index
      %13 = vector.load %arg5[%c0_12, %c0_13] : memref<1x128xf32, #tpu.memory_space<vmem>>, vector<1x128xf32>
      %14 = vector.broadcast %13 : vector<1x128xf32> to vector<8x128xf32>
      %15 = arith.addf %12, %14 : vector<8x128xf32>
      %cst_14 = arith.constant 3.000000e+01 : f32
      %16 = vector.broadcast %cst_14 : f32 to vector<8x128xf32>
      %17 = arith.mulf %16, %15 : vector<8x128xf32>
      %18 = math.sin %17 : vector<8x128xf32>
      %c0_15 = arith.constant 0 : index
      %c0_16 = arith.constant 0 : index
      %19 = vector.load %arg6[%c0_15, %c0_16] : memref<8x128xf32, #tpu.memory_space<vmem>>, vector<8x128xf32>
      tpu.vector_store %arg6[%c0_15, %c0_16], %18 {strides = array<i32>} : memref<8x128xf32, #tpu.memory_space<vmem>>, vector<8x128xf32>,
    } else {
    }
    return
  }
  func.func @transform_0(%arg0: i32, %arg1: i32, %arg2: i32) -> (i32, i32) {
    %c0_i32 = arith.constant 0 : i32
    return %arg0, %arg2 : i32, i32
  }
  func.func @transform_1(%arg0: i32, %arg1: i32, %arg2: i32) -> (i32, i32) {
    %c0_i32 = arith.constant 0 : i32
    return %arg2, %arg1 : i32, i32
  }
  func.func @transform_2(%arg0: i32, %arg1: i32, %arg2: i32) -> (i32, i32) {
    %c0_i32 = arith.constant 0 : i32
    %c0_i32_0 = arith.constant 0 : i32
    return %c0_i32, %arg1 : i32, i32
  }
  func.func @transform_3(%arg0: i32, %arg1: i32, %arg2: i32) -> (i32, i32) {
    %c0_i32 = arith.constant 0 : i32
    return %arg0, %arg1 : i32, i32
  }
}

</mosaic_0001>

<llo_original>
// kernel: tpu_custom_call.1
$region0: #{tpu_custom_call.1}
  #allocation0 [shape = 'u32[]', space=smem, size = 0x4, offset = 0x4, fixed_abs, tag = 'smem constant byte address 0x4 - core index']
  #allocation1 [shape = 'u32[144,128]{1,0:T(1,128)}', space=vmem, size = 0x12000, scoped, tag = 'internal scratch']
  #allocation2 [shape = 'f32[8,128]{1,0:T(8,128)}', space=vmem, size = 0x1000, scoped, tag = 'scratch operand']
  %s0 = inlined_call_operand.hbm [shape: f32[8,32], index: 0, kind: input, shape index: {}]
  %s1 = inlined_call_operand.hbm [shape: f32[32,128], index: 1, kind: input, shape index: {}]
  %s2 = inlined_call_operand.vmem [shape: f32[1,128], index: 2, kind: input, shape index: {}]
  %s3 = inlined_call_operand.hbm [shape: f32[8,128], index: 3, kind: output, shape index: {}]
  %s4 = sld [smem:[#allocation0]]
  $region38: #{tpu_custom_call.1} parent=0
    _
  %s6 = ssub.s32 1, %s4
  %s7 = scalar_select 0, %s6, %s4
  $region1: #{tpu_custom_call.1} parent=0
    #allocation3 [shape = 'u8[4096]{0}', space=vmem, size = 0x1000, scoped, tag = 'input window, operand 0, single buffered']
    #allocation4 [shape = 's32[1]{0}', space=sflag, size = 0x4, scoped, tag = 'scoped memory for tpu_custom_call.1']
    #allocation5 [shape = 's32[1]{0}', space=sflag, size = 0x4, scoped, tag = 'scoped memory for tpu_custom_call.1']
    #allocation6 [shape = 'u8[16384]{0}', space=vmem, size = 0x4000, scoped, tag = 'input window, operand 1, single buffered']
    #allocation7 [shape = 's32[1]{0}', space=sflag, size = 0x4, scoped, tag = 'scoped memory for tpu_custom_call.1']
    #allocation8 [shape = 'u8[4096]{0}', space=vmem, size = 0x1000, scoped, tag = 'output window, operand 0, single buffered']
    %8 = vsyncpa [#allocation4], 0
    %9 = vsyncpa [#allocation7], 0
    %10 = vsyncpa [#allocation5], 0
    // Predicated region
    $region2: #{tpu_custom_call.1} parent=1 // pred_check
      _
    $region3: #{tpu_custom_call.1} parent=1 // pred_check_branch
      %12 = sbr.rel (0) target = $region5
    $region4: #{tpu_custom_call.1} parent=1 // pred_region
      %s14 = ssub.s32 128, 128
      %15 = vsyncadd [#allocation4], %s14
      %s17 = sshll.u32 [#allocation3], 4
      %s18 = int_to_ptr.vmem [resolvable:$true] %s17
      %20 = dma.hbm_to_vmem [thread:$0]  %s0, 128, %s18, [#allocation4]
    $region5: #{tpu_custom_call.1} parent=1 // pred_fallthru
      _
    // Predicated region
    $region6: #{tpu_custom_call.1} parent=1 // pred_check
      _
    $region7: #{tpu_custom_call.1} parent=1 // pred_check_branch
      %22 = sbr.rel (0) target = $region9
    $region8: #{tpu_custom_call.1} parent=1 // pred_region
      %s24 = ssub.s32 512, 512
      %25 = vsyncadd [#allocation7], %s24
      %s26 = sshll.u32 [#allocation6], 4
      %s27 = int_to_ptr.vmem [resolvable:$true] %s26
      %32 = dma.hbm_to_vmem [thread:$0]  %s1, 512, %s27, [#allocation7], 128, 128, 8
    $region9: #{tpu_custom_call.1} parent=1 // pred_fallthru
      _
    // Predicated region
    $region10: #{tpu_custom_call.1} parent=1 // pred_check
      _
    $region11: #{tpu_custom_call.1} parent=1 // pred_check_branch
      %34 = sbr.rel (0) target = $region13
    $region12: #{tpu_custom_call.1} parent=1 // pred_region
      _
    $region13: #{tpu_custom_call.1} parent=1 // pred_fallthru
      _
    // Predicated region
    $region14: #{tpu_custom_call.1} parent=1 // pred_check
      _
    $region15: #{tpu_custom_call.1} parent=1 // pred_check_branch
      %36 = sbr.rel (0) target = $region17
    $region16: #{tpu_custom_call.1} parent=1 // pred_region
      %37 = dma.done [#allocation4], 128
    $region17: #{tpu_custom_call.1} parent=1 // pred_fallthru
      _
    // Predicated region
    $region18: #{tpu_custom_call.1} parent=1 // pred_check
      _
    $region19: #{tpu_custom_call.1} parent=1 // pred_check_branch
      %39 = sbr.rel (0) target = $region21
    $region20: #{tpu_custom_call.1} parent=1 // pred_region
      %40 = dma.done [#allocation7], 512
    $region21: #{tpu_custom_call.1} parent=1 // pred_fallthru
      _
    %p41 = scmp.eq.s32.totalorder 0, 0
    // Predicated region
    $region22: #{tpu_custom_call.1} parent=1 // pred_check
      %p42 = pneg %p41
    $region23: #{tpu_custom_call.1} parent=1 // pred_check_branch
      %44 = sbr.rel (%p42) target = $region25
    $region24: #{tpu_custom_call.1} parent=1 // pred_region
      %45 = vst [vmem:[#allocation2] sm:$0xff] 0.0
    $region25: #{tpu_custom_call.1} parent=1 // pred_fallthru
      _
    %v46 = vld [vmem:[#allocation2] sm:$0xff]
    %v47 = vld [vmem:[#allocation3] sm:$0xff]
    %v48 = vld [vmem:[#allocation6] sm:$0xff]
    %v49 = vld [vmem:[#allocation6 + $0x8] sm:$0xff]
    %v50 = vld [vmem:[#allocation6 + $0x10] sm:$0xff]
    %v51 = vld [vmem:[#allocation6 + $0x18] sm:$0xff]
    %vm52 = vcmask 261120
    %v54 = vsel %vm52, %v47, 0
    %56 = vmatprep.subr.mxu0 0.0
    %57 = vmatpush1.msra.mxu0 %v48
    %58 = vmatprep.subr.mxu0 0.0
    %59 = vmatpush1.msra.mxu0 %v49
    %60 = vmatprep.subr.mxu0 0.0
    %61 = vmatpush1.msra.mxu0 %v50
    %62 = vmatprep.subr.mxu0 0.0
    %63 = vmatpush1.msra.mxu0 %v51
    %64 = vmatprep.subr.mxu0 0.0
    %65 = vmatpush1.msra.mxu0 0.0
    %66 = vmatprep.subr.mxu0 0.0
    %67 = vmatpush1.msra.mxu0 0.0
    %68 = vmatprep.subr.mxu0 0.0
    %69 = vmatpush1.msra.mxu0 0.0
    %70 = vmatprep.subr.mxu0 0.0
    %71 = vmatpush1.msra.mxu0 0.0
    %72 = vmatprep.subr.mxu0 0.0
    %73 = vmatpush1.msra.mxu0 0.0
    %74 = vmatprep.subr.mxu0 0.0
    %75 = vmatpush1.msra.mxu0 0.0
    %76 = vmatprep.subr.mxu0 0.0
    %77 = vmatpush1.msra.mxu0 0.0
    %78 = vmatprep.subr.mxu0 0.0
    %79 = vmatpush1.msra.mxu0 0.0
    %80 = vmatprep.subr.mxu0 0.0
    %81 = vmatpush1.msra.mxu0 0.0
    %82 = vmatprep.subr.mxu0 0.0
    %83 = vmatpush1.msra.mxu0 0.0
    %84 = vmatprep.subr.mxu0 0.0
    %85 = vmatpush1.msra.mxu0 0.0
    %86 = vmatprep.subr.mxu0 0.0
    %87 = vmatpush1.msra.mxu0 0.0
    %88 = vmatprep.subr.mxu0 0.0
    %89 = vmatpush1.msra.mxu0 0.0
    %90 = vmatprep.subr.mxu0 0.0
    %91 = vmatpush1.msra.mxu0 0.0
    %92 = vmatprep.subr.mxu0 0.0
    %93 = vmatpush1.msra.mxu0 0.0
    %94 = vmatprep.subr.mxu0 0.0
    %95 = vmatpush1.msra.mxu0 0.0
    %96 = vmatprep.subr.mxu0 0.0
    %97 = vmatpush1.msra.mxu0 0.0
    %98 = vmatprep.subr.mxu0 0.0
    %99 = vmatpush1.msra.mxu0 0.0
    %100 = vmatprep.subr.mxu0 0.0
    %101 = vmatpush1.msra.mxu0 0.0
    %102 = vmatprep.subr.mxu0 0.0
    %103 = vmatpush1.msra.mxu0 0.0
    %104 = vmatprep.subr.mxu0 0.0
    %105 = vmatpush1.msra.mxu0 0.0
    %106 = vmatprep.subr.mxu0 0.0
    %107 = vmatpush1.msra.mxu0 0.0
    %108 = vmatprep.subr.mxu0 0.0
    %109 = vmatpush1.msra.mxu0 0.0
    %110 = vmatprep.subr.mxu0 0.0
    %111 = vmatpush1.msra.mxu0 0.0
    %112 = vmatprep.subr.mxu0 0.0
    %113 = vmatpush1.msra.mxu0 0.0
    %114 = vmatprep.subr.mxu0 0.0
    %115 = vmatpush1.msra.mxu0 0.0
    %116 = vmatprep.subr.mxu0 0.0
    %117 = vmatpush1.msra.mxu0 0.0
    %118 = vmatprep.subr.mxu0 0.0
    %119 = vmatpush1.msra.mxu0 0.0
    %120 = vmatprep.mubr.f32.mxu0 0.0
    %121 = vmatmul.mubr.f32.gmra.mrb[0].mxu0 %v54
    %v122 = vpop.f32.mrb[0].mxu0
    %v123 = vadd.f32 0.0, %v122
    %v124 = vpop.f32.mrb[0].mxu0
    %125 = vdwg.mxu0
    %v126 = vadd.f32 %v46, %v123
    %127 = vst [vmem:[#allocation2] sm:$0xff] %v126
    // Predicated region
    $region26: #{tpu_custom_call.1} parent=1 // pred_check
      %p128 = pneg %p41
    $region27: #{tpu_custom_call.1} parent=1 // pred_check_branch
      %130 = sbr.rel (%p128) target = $region29
    $region28: #{tpu_custom_call.1} parent=1 // pred_region
      %v131 = vld [vmem:[#allocation2] sm:$0xff]
      %v132 = vld [vmem:[%s2] sm:$0x1]
      %v134 = vlaneseq
      %v135 = vshrl.u32 %v134, 7
      %v136 = vsub.s32 0, %v135
      %v137 = vrot.slane %v132, %v136
      %v139 = vadd.f32 %v131, %v137
      %v140 = vmul.f32 %v139, 30.0
      %v141 = vand.u32 2147483647, %v140
      %vm142 = vcmp.le.f32.partialorder %v141, 0.7853982
      %vm143 = vcmp.lt.s32.totalorder %v140, 0
      %v144 = vand.u32 %v140, 2139095040
      %v145 = vshrl.u32 %v144, 23
      %v146 = vsub.s32 %v145, 127
      %v147 = vand.u32 2147483647, %v140
      %v148 = vand.u32 %v147, 8388607
      %v149 = vor.u32 %v148, 8388608
      %v150 = vsub.s32 0, %v149
      %v151 = vadd.s32 %v146, 1
      %vm152 = vcmp.gt.s32.totalorder %v151, 0
      %v153 = vsel %vm152, %v151, 0
      %v154 = vshrl.u32 %v153, 5
      %v155 = vand.u32 %v153, 31
      %v156 = vsub.s32 32, %v155
      %v157 = vshrl.u32 683565275, %v156
      %v158 = vshll.u32 683565275, %v155
      %v159 = vshrl.u32 2475754826, %v156
      %v160 = vor.u32 %v158, %v159
      %v161 = vshll.u32 2475754826, %v155
      %v162 = vshrl.u32 2131351028, %v156
      %v163 = vor.u32 %v161, %v162
      %v164 = vshll.u32 2131351028, %v155
      %v165 = vshrl.u32 2102212464, %v156
      %v166 = vor.u32 %v164, %v165
      %v167 = vshll.u32 2102212464, %v155
      %v168 = vshrl.u32 920167782, %v156
      %v169 = vor.u32 %v167, %v168
      %v170 = vshll.u32 920167782, %v155
      %v171 = vshrl.u32 1326507024, %v156
      %v172 = vor.u32 %v170, %v171
      %vm173 = vcmp.lt.s32.totalorder %v154, 1
      %vm174 = vcmp.lt.s32.totalorder %v154, 2
      %vm175 = vcmp.lt.s32.totalorder %v154, 3
      %vm176 = vcmp.lt.s32.totalorder %v154, 4
      %v177 = vsel %vm173, %v157, %v160
      %v178 = vsel %vm176, %v166, 2102212464
      %v179 = vsel %vm175, %v163, %v178
      %v180 = vsel %vm174, %v177, %v179
      %v181 = vsel %vm173, %v160, %v163
      %v182 = vsel %vm176, %v169, 920167782
      %v183 = vsel %vm175, %v166, %v182
      %v184 = vsel %vm174, %v181, %v183
      %v185 = vsel %vm173, %v163, %v166
      %v186 = vsel %vm176, %v172, 1326507024
      %v187 = vsel %vm175, %v169, %v186
      %v188 = vsel %vm174, %v185, %v187
      %v189 = vshll.u32 %v149, 8
      %v190 = vmul.u32.u64.compose %v189, %v188
      %v191 = vextract.low.u32 %v190
      %v192 = vextract.high.u32 %v190
      %v193 = vmul.u32.u64.compose %v189, %v184
      %v194 = vextract.low.u32 %v193
      %v195 = vextract.high.u32 %v193
      %v196 = vmul.u32 %v189, %v180
      %v197 = vadd.s32 %v192, %v194
      %vm198 = vc.u32 %v192, %v194
      %v199 = vadd.s32 %v195, 1
      %v200 = vsel %vm198, %v199, %v195
      %v201 = vadd.s32 %v196, %v200
      %v202 = vadd.s32 %v201, 536870912
      %v203 = vshrl.u32 %v202, 30
      %v204 = vshll.u32 %v203, 30
      %v205 = vsub.s32 %v201, %v204
      %vm206 = vcmp.lt.s32.totalorder %v205, 0
      %v207 = vsub.s32 0, %v205
      %v208 = vsel %vm206, %v207, %v205
      %v209 = vclz %v208
      %v210 = vsub.s32 %v209, 2
      %vm211 = vcmp.gt.s32.totalorder 0, %v210
      %v212 = vsel %vm211, 0, %v210
      %v213 = vsub.s32 32, %v212
      %v214 = vshll.u32 %v205, %v212
      %v215 = vshrl.u32 %v197, %v213
      %v216 = vor.u32 %v214, %v215
      %v217 = vsub.s32 4294967266, %v212
      %v218 = vadd.s32 %v217, 127
      %v219 = vshll.u32 %v218, 23
      %v220 = vor.u32 4788187, %v219
      %v221 = vand.u32 2147483647, %v220
      %v223 = vcvt.s32.f32 %v216
      %v224 = vmul.f32 %v223, %v221
      %v225 = vxor.u32 %v224, 2147483648
      %v226 = vsel %vm143, %v225, %v224
      %v227 = vsub.s32 4, %v203
      %v228 = vsel %vm143, %v227, %v203
      %v229 = vsel %vm142, %v140, %v226
      %v230 = vsel %vm142, 0, %v228
      %v231 = vcosq.f32.pop %v229
      %v232 = vsinq.f32.pop %v229
      %vm233 = vweird.f32 %v140
      %v234 = vadd.s32 %v230, 3
      %v235 = vand.u32 %v234, 3
      %vm236 = vcmp.lt.s32.totalorder %v235, 2
      %vm237 = vcmp.eq.s32.totalorder %v235, 0
      %v238 = vxor.u32 %v232, 2147483648
      %v239 = vsel %vm237, %v231, %v238
      %vm240 = vcmp.eq.s32.totalorder %v235, 2
      %v241 = vxor.u32 %v231, 2147483648
      %v242 = vsel %vm240, %v241, %v232
      %v243 = vsel %vm236, %v239, %v242
      %v244 = vsel %vm233, nan, %v243
      %245 = vst [vmem:[#allocation8] sm:$0xff] %v244
    $region29: #{tpu_custom_call.1} parent=1 // pred_fallthru
      _
    // Predicated region
    $region30: #{tpu_custom_call.1} parent=1 // pred_check
      _
    $region31: #{tpu_custom_call.1} parent=1 // pred_check_branch
      %247 = sbr.rel (0) target = $region33
    $region32: #{tpu_custom_call.1} parent=1 // pred_region
      %s249 = ssub.s32 128, 128
      %250 = vsyncadd [#allocation5], %s249
      %s252 = sshll.u32 [#allocation8], 4
      %s253 = int_to_ptr.vmem [resolvable:$true] %s252
      %255 = dma.vmem_to_hbm [thread:$0]  %s253, 128, %s3, [#allocation5]
    $region33: #{tpu_custom_call.1} parent=1 // pred_fallthru
      _
    // Predicated region
    $region34: #{tpu_custom_call.1} parent=1 // pred_check
      _
    $region35: #{tpu_custom_call.1} parent=1 // pred_check_branch
      %257 = sbr.rel (0) target = $region37
    $region36: #{tpu_custom_call.1} parent=1 // pred_region
      %258 = dma.done [#allocation5], 128
    $region37: #{tpu_custom_call.1} parent=1 // pred_fallthru
      _
    %259 = vsyncpa [#allocation4], 1
    %260 = vsyncpa [#allocation7], 1
    %261 = vsyncpa [#allocation5], 1

</llo_original>
